<compile_context>
chip_gen: v6e
topology: v6e:2x2x1
jax: 0.10.0
libtpu: 0.0.40
codegen_flags: <defaults>
</compile_context>

<pallas_src>
import jax
import jax.numpy as jnp
from jax.experimental import pallas as pl
from jax.experimental.pallas import tpu as pltpu

_LANES = 128

_COMPILER_PARAMS = pltpu.CompilerParams(
    dimension_semantics=("parallel",),
    vmem_limit_bytes=48 * 1024 * 1024,
)


def _pick_row_tile(num_rows, lane_width, itemsize):
    """Rows per grid step for the 1-D row grid.

    VMEM accounting per block element: 2x input + 2x output (double-buffered)
    plus ~4 f32-sized live intermediates (x_f32, centered, squared, stats).
    A 36 MiB budget keeps the fully-accounted footprint under v7x's 64 MiB
    physical VMEM (48 MiB scoped limit set above) while giving ~4-5 MiB input
    blocks, so per-grid-step overhead is <10% of HBM time on every generation.
    """
    budget = 36 * 1024 * 1024
    bytes_per_elem = 4 * itemsize + 4 * 4
    tr = budget // (lane_width * bytes_per_elem)
    tr = max(16, (tr // 16) * 16)
    if tr >= num_rows:
        return num_rows
    steps = pl.cdiv(num_rows, tr)
    if steps % 2 == 1:
        steps += 1                      # even step count -> balanced v7x megacore
    tr = pl.cdiv(num_rows, steps)
    tr = pl.cdiv(tr, 16) * 16           # keep 16-row (sublane/packing) granularity
    return min(tr, num_rows)


def _make_packed_kernel(c, eps):
    """LayerNorm over segments of width c packed g = G // c per 128-lane row."""
    inv_c = 1.0 / float(c)
    eps = float(eps)

    def kernel(x_ref, w_ref, b_ref, s_ref, o_ref):
        seg = s_ref[...]                       # (G, G) bf16 block-diagonal 0/1
        x_in = x_ref[...]
        x = x_in.astype(jnp.float32)           # (tr, G)

        def seg_sum(v):
            # Segmented lane-sum on the (otherwise idle) MXU, f32-faithful:
            # split v into exact bf16 hi + lo parts (seg is exact in bf16), so
            # both dots are native single-pass bf16 matmuls with f32 accum.
            hi = v.astype(jnp.bfloat16)
            lo = (v - hi.astype(jnp.float32)).astype(jnp.bfloat16)
            return (jnp.dot(hi, seg, preferred_element_type=jnp.float32)
                    + jnp.dot(lo, seg, preferred_element_type=jnp.float32))

        if x_in.dtype == jnp.bfloat16:
            # bf16 inputs are already exact in bf16 -- one pass suffices.
            s1 = jnp.dot(x_in, seg, preferred_element_type=jnp.float32)
        else:
            s1 = seg_sum(x)
        mu = s1 * inv_c                        # per-segment mean, lane-broadcast
        d = x - mu
        s2 = seg_sum(d * d)                    # centered second moment (no cancellation)
        inv = jax.lax.rsqrt(s2 * inv_c + eps)  # EUP
        w = w_ref[...].astype(jnp.float32)
        b = b_ref[...].astype(jnp.float32)
        o_ref[...] = (d * inv * w + b).astype(o_ref.dtype)

    return kernel


def _make_unpacked_kernel(c, eps):
    """Plain LayerNorm over the last dim (one logical row per kernel row)."""
    inv_c = 1.0 / float(c)
    eps = float(eps)

    def kernel(x_ref, w_ref, b_ref, o_ref):
        x = x_ref[...].astype(jnp.float32)
        mu = jnp.sum(x, axis=-1, keepdims=True) * inv_c        # XLU reduce
        d = x - mu
        var = jnp.sum(d * d, axis=-1, keepdims=True) * inv_c   # centered
        inv = jax.lax.rsqrt(var + eps)                         # EUP
        w = w_ref[...].astype(jnp.float32)
        b = b_ref[...].astype(jnp.float32)
        o_ref[...] = (d * inv * w + b).astype(o_ref.dtype)

    return kernel


def withbias_layernorm(x, weight, bias, *, eps=1e-5, lane_pack=True, row_tile=None):
    """LayerNorm over the last dim with affine (weight, bias), eps=1e-5,
    population variance (unbiased=False) -- matches WithBias_LayerNorm."""
    orig_shape = x.shape
    C = orig_shape[-1]
    assert weight.shape == (C,) and bias.shape == (C,)

    R = 1
    for s in orig_shape[:-1]:
        R *= s

    # Lane packing: pack g = 128 // C logical rows per kernel row when C <= 64.
    g = 1
    if lane_pack and 2 * C <= _LANES:
        g_cand = _LANES // C
        if R % g_cand == 0:
            g = g_cand
        # else: unpacked fallback.  A second tiny call for the < g-row
        # remainder would force a concat (an extra full HBM pass), which costs
        # more than the lane density it buys.
        # TODO(synk): revisit if misaligned row counts turn out to be common.
    G = g * C
    rows = R // g
    xk = x.reshape(rows, G)                    # free row-major view (no copy)

    wk = (jnp.tile(weight, g) if g > 1 else weight).reshape(1, G)
    bk = (jnp.tile(bias, g) if g > 1 else bias).reshape(1, G)

    if row_tile is not None:                   # test hook to force multi-step grids
        tr = min(int(row_tile), rows)
    else:
        tr = _pick_row_tile(rows, G, x.dtype.itemsize)
    grid = (pl.cdiv(rows, tr),)                # cdiv grid; tail block is read-padded
                                               # and write-masked by Pallas (no jnp.pad).

    x_spec = pl.BlockSpec((tr, G), lambda i: (i, 0))
    wb_spec = pl.BlockSpec((1, G), lambda i: (0, 0))        # resident across grid

    if g > 1:
        seg_id = jnp.arange(G, dtype=jnp.int32) // C
        seg_mat = (seg_id[:, None] == seg_id[None, :]).astype(jnp.bfloat16)
        out = pl.pallas_call(
            _make_packed_kernel(C, eps),
            out_shape=jax.ShapeDtypeStruct((rows, G), x.dtype),
            grid_spec=pltpu.PrefetchScalarGridSpec(
                num_scalar_prefetch=0,
                grid=grid,
                in_specs=[
                    x_spec,
                    wb_spec,
                    wb_spec,
                    pl.BlockSpec((G, G), lambda i: (0, 0)),  # resident (<=32 KiB)
                ],
                out_specs=pl.BlockSpec((tr, G), lambda i: (i, 0)),
            ),
            compiler_params=_COMPILER_PARAMS,
        )(xk, wk, bk, seg_mat)
    else:
        out = pl.pallas_call(
            _make_unpacked_kernel(C, eps),
            out_shape=jax.ShapeDtypeStruct((rows, G), x.dtype),
            grid_spec=pltpu.PrefetchScalarGridSpec(
                num_scalar_prefetch=0,
                grid=grid,
                in_specs=[x_spec, wb_spec, wb_spec],
                out_specs=pl.BlockSpec((tr, G), lambda i: (i, 0)),
            ),
            compiler_params=_COMPILER_PARAMS,
        )(xk, wk, bk)

    return out.reshape(orig_shape)             # free view back to the original shape


def _reference(x, weight, bias, eps=1e-5):
    x32 = x.astype(jnp.float32)
    mu = jnp.mean(x32, axis=-1, keepdims=True)
    var = jnp.mean((x32 - mu) ** 2, axis=-1, keepdims=True)
    y = ((x32 - mu) / jnp.sqrt(var + eps) * weight.astype(jnp.float32)
         + bias.astype(jnp.float32))
    return y.astype(x.dtype)


if __name__ == "__main__":
    key = jax.random.PRNGKey(0)
    ks = jax.random.split(key, 10)

    def check(name, x, w, b, atol, rtol, **kw):
        y = jax.block_until_ready(withbias_layernorm(x, w, b, **kw))
        r = _reference(x, w, b)
        assert y.shape == x.shape and y.dtype == x.dtype, name
        ok = jnp.allclose(y.astype(jnp.float32), r.astype(jnp.float32),
                          atol=atol, rtol=rtol)
        assert bool(ok), name

    # 1) C=32 -> packed (g=4, G=128); large mean/std exercises the centered
    #    variance; small row_tile forces a multi-step cdiv grid with a partial
    #    (read-padded, write-masked) last block.
    x = jax.random.normal(ks[0], (2, 10, 10, 32), dtype=jnp.float32) * 2.0 + 3.0
    w = 1.0 + 0.1 * jax.random.normal(ks[1], (32,), dtype=jnp.float32)
    b = 0.1 * jax.random.normal(ks[2], (32,), dtype=jnp.float32)
    check("packed_c32_tail", x, w, b, 1e-4, 1e-4, row_tile=16)

    # 2) C=48 -> packed with G = 96 lanes (non-power-of-two small C).
    x = jax.random.normal(ks[3], (2, 7, 9, 48), dtype=jnp.float32)
    w = 1.0 + 0.1 * jax.random.normal(ks[4], (48,), dtype=jnp.float32)
    b = 0.1 * jax.random.normal(ks[5], (48,), dtype=jnp.float32)
    check("packed_c48", x, w, b, 1e-4, 1e-4)

    # 3) C=160 -> unpacked path; multi-step grid with a partial tail block.
    x = jax.random.normal(ks[6], (2, 5, 7, 160), dtype=jnp.float32)
    w = 1.0 + 0.1 * jax.random.normal(ks[7], (160,), dtype=jnp.float32)
    b = 0.1 * jax.random.normal(ks[8], (160,), dtype=jnp.float32)
    check("unpacked_c160_tail", x, w, b, 1e-4, 1e-4, row_tile=16)

    # 4) C=32 but row count not divisible by g=4 -> unpacked fallback path.
    x = jax.random.normal(ks[9], (3, 7, 32), dtype=jnp.float32)
    w = jnp.ones((32,), dtype=jnp.float32)
    b = jnp.zeros((32,), dtype=jnp.float32)
    check("fallback_c32_odd_rows", x, w, b, 1e-4, 1e-4)

    # 5) bf16 inputs on the packed path (C=64 -> g=2, G=128; single-pass mean dot).
    x = jax.random.normal(ks[0], (2, 4, 8, 64), dtype=jnp.float32).astype(jnp.bfloat16)
    w = (1.0 + 0.1 * jax.random.normal(ks[1], (64,), dtype=jnp.float32)).astype(jnp.bfloat16)
    b = (0.1 * jax.random.normal(ks[2], (64,), dtype=jnp.float32)).astype(jnp.bfloat16)
    check("packed_c64_bf16", x, w, b, 5e-2, 5e-2)

    print("KERNEL_OK")
</pallas_src>

<mosaic_0001>
module attributes {stable_mosaic.version = 11 : i64} {
  func.func @kernel(%arg0: i32, %arg1: memref<16x128xf32, #tpu.memory_space<vmem>>, %arg2: memref<1x128xf32, #tpu.memory_space<vmem>>, %arg3: memref<1x128xf32, #tpu.memory_space<vmem>>, %arg4: memref<128x128xbf16, #tpu.memory_space<vmem>>, %arg5: memref<16x128xf32, #tpu.memory_space<vmem>>) attributes {dimension_semantics = [#tpu.dimension_semantics<parallel>], iteration_bounds = array<i64: 4>, scalar_prefetch = 0 : i64, scratch_operands = 0 : i64, tpu.core_type = #tpu.core_type<tc>, window_params = [{transform_indices = @transform_0, window_bounds = array<i64: 16, 128>}, {pipeline_mode = #tpu.pipeline_mode<synchronous>, transform_indices = @transform_1, window_bounds = array<i64: 1, 128>}, {pipeline_mode = #tpu.pipeline_mode<synchronous>, transform_indices = @transform_2, window_bounds = array<i64: 1, 128>}, {pipeline_mode = #tpu.pipeline_mode<synchronous>, transform_indices = @transform_3, window_bounds = array<i64: 128, 128>}, {transform_indices = @transform_4, window_bounds = array<i64: 16, 128>}]} {
    %c0 = arith.constant 0 : index
    %c0_0 = arith.constant 0 : index
    %0 = vector.load %arg4[%c0, %c0_0] : memref<128x128xbf16, #tpu.memory_space<vmem>>, vector<128x128xbf16>
    %c0_1 = arith.constant 0 : index
    %c0_2 = arith.constant 0 : index
    %1 = vector.load %arg1[%c0_1, %c0_2] : memref<16x128xf32, #tpu.memory_space<vmem>>, vector<16x128xf32>
    %2 = arith.truncf %1 : vector<16x128xf32> to vector<16x128xbf16>
    %3 = arith.extf %2 : vector<16x128xbf16> to vector<16x128xf32>
    %4 = arith.subf %1, %3 : vector<16x128xf32>
    %5 = arith.truncf %4 : vector<16x128xf32> to vector<16x128xbf16>
    %cst = arith.constant dense<0.000000e+00> : vector<16x128xf32>
    %6 = tpu.matmul %2, %0, %cst {dimension_numbers = #tpu.dot_dimension_numbers<[1], [0], [0], [1], [0, 0, 1, 1], [], []>} : vector<16x128xbf16>, vector<128x128xbf16>, vector<16x128xf32> -> vector<16x128xf32>
    %cst_3 = arith.constant dense<0.000000e+00> : vector<16x128xf32>
    %7 = tpu.matmul %5, %0, %cst_3 {dimension_numbers = #tpu.dot_dimension_numbers<[1], [0], [0], [1], [0, 0, 1, 1], [], []>} : vector<16x128xbf16>, vector<128x128xbf16>, vector<16x128xf32> -> vector<16x128xf32>
    %8 = arith.addf %6, %7 : vector<16x128xf32>
    %cst_4 = arith.constant 3.125000e-02 : f32
    %9 = vector.broadcast %cst_4 : f32 to vector<16x128xf32>
    %10 = arith.mulf %8, %9 : vector<16x128xf32>
    %11 = arith.subf %1, %10 : vector<16x128xf32>
    %12 = arith.mulf %11, %11 : vector<16x128xf32>
    %13 = arith.truncf %12 : vector<16x128xf32> to vector<16x128xbf16>
    %14 = arith.extf %13 : vector<16x128xbf16> to vector<16x128xf32>
    %15 = arith.subf %12, %14 : vector<16x128xf32>
    %16 = arith.truncf %15 : vector<16x128xf32> to vector<16x128xbf16>
    %cst_5 = arith.constant dense<0.000000e+00> : vector<16x128xf32>
    %17 = tpu.matmul %13, %0, %cst_5 {dimension_numbers = #tpu.dot_dimension_numbers<[1], [0], [0], [1], [0, 0, 1, 1], [], []>} : vector<16x128xbf16>, vector<128x128xbf16>, vector<16x128xf32> -> vector<16x128xf32>
    %cst_6 = arith.constant dense<0.000000e+00> : vector<16x128xf32>
    %18 = tpu.matmul %16, %0, %cst_6 {dimension_numbers = #tpu.dot_dimension_numbers<[1], [0], [0], [1], [0, 0, 1, 1], [], []>} : vector<16x128xbf16>, vector<128x128xbf16>, vector<16x128xf32> -> vector<16x128xf32>
    %19 = arith.addf %17, %18 : vector<16x128xf32>
    %cst_7 = arith.constant 3.125000e-02 : f32
    %20 = vector.broadcast %cst_7 : f32 to vector<16x128xf32>
    %21 = arith.mulf %19, %20 : vector<16x128xf32>
    %cst_8 = arith.constant 9.99999974E-6 : f32
    %22 = vector.broadcast %cst_8 : f32 to vector<16x128xf32>
    %23 = arith.addf %21, %22 : vector<16x128xf32>
    %24 = math.rsqrt %23 : vector<16x128xf32>
    %c0_9 = arith.constant 0 : index
    %c0_10 = arith.constant 0 : index
    %25 = vector.load %arg2[%c0_9, %c0_10] : memref<1x128xf32, #tpu.memory_space<vmem>>, vector<1x128xf32>
    %c0_11 = arith.constant 0 : index
    %c0_12 = arith.constant 0 : index
    %26 = vector.load %arg3[%c0_11, %c0_12] : memref<1x128xf32, #tpu.memory_space<vmem>>, vector<1x128xf32>
    %27 = arith.mulf %11, %24 : vector<16x128xf32>
    %28 = vector.broadcast %25 : vector<1x128xf32> to vector<16x128xf32>
    %29 = arith.mulf %27, %28 : vector<16x128xf32>
    %30 = vector.broadcast %26 : vector<1x128xf32> to vector<16x128xf32>
    %31 = arith.addf %29, %30 : vector<16x128xf32>
    %c0_13 = arith.constant 0 : index
    %c0_14 = arith.constant 0 : index
    %32 = vector.load %arg5[%c0_13, %c0_14] : memref<16x128xf32, #tpu.memory_space<vmem>>, vector<16x128xf32>
    tpu.vector_store %arg5[%c0_13, %c0_14], %31 {strides = array<i32>} : memref<16x128xf32, #tpu.memory_space<vmem>>, vector<16x128xf32>,
    return
  }
  func.func @transform_0(%arg0: i32) -> (i32, i32) {
    %c0_i32 = arith.constant 0 : i32
    %c0_i32_0 = arith.constant 0 : i32
    return %arg0, %c0_i32 : i32, i32
  }
  func.func @transform_1(%arg0: i32) -> (i32, i32) {
    %c0_i32 = arith.constant 0 : i32
    %c0_i32_0 = arith.constant 0 : i32
    %c0_i32_1 = arith.constant 0 : i32
    return %c0_i32, %c0_i32_0 : i32, i32
  }
  func.func @transform_2(%arg0: i32) -> (i32, i32) {
    %c0_i32 = arith.constant 0 : i32
    %c0_i32_0 = arith.constant 0 : i32
    %c0_i32_1 = arith.constant 0 : i32
    return %c0_i32, %c0_i32_0 : i32, i32
  }
  func.func @transform_3(%arg0: i32) -> (i32, i32) {
    %c0_i32 = arith.constant 0 : i32
    %c0_i32_0 = arith.constant 0 : i32
    %c0_i32_1 = arith.constant 0 : i32
    return %c0_i32, %c0_i32_0 : i32, i32
  }
  func.func @transform_4(%arg0: i32) -> (i32, i32) {
    %c0_i32 = arith.constant 0 : i32
    %c0_i32_0 = arith.constant 0 : i32
    return %arg0, %c0_i32 : i32, i32
  }
}

</mosaic_0001>

<llo_original>
// kernel: tpu_custom_call.1
$region0: #{tpu_custom_call.1}
  #allocation0 [shape = 'u32[]', space=smem, size = 0x4, offset = 0x4, fixed_abs, tag = 'smem constant byte address 0x4 - core index']
  #allocation1 [shape = 'u32[144,128]{1,0:T(1,128)}', space=vmem, size = 0x12000, scoped, tag = 'internal scratch']
  %s0 = inlined_call_operand.hbm [shape: f32[50,128], index: 0, kind: input, shape index: {}]
  %s1 = inlined_call_operand.vmem [shape: f32[1,128], index: 1, kind: input, shape index: {}]
  %s2 = inlined_call_operand.vmem [shape: f32[1,128], index: 2, kind: input, shape index: {}]
  %s3 = inlined_call_operand.hbm [shape: bf16[128,128], index: 3, kind: input, shape index: {}]
  %s4 = inlined_call_operand.hbm [shape: f32[50,128], index: 4, kind: output, shape index: {}]
  %s5 = sld [smem:[#allocation0]]
  $region57: #{tpu_custom_call.1} parent=0
    _
  %s7 = ssub.s32 1, %s5
  %s8 = scalar_select 0, %s7, %s5
  $region1: #{tpu_custom_call.1} parent=0
    #allocation2 [shape = 'u8[16384]{0}', space=vmem, size = 0x4000, scoped, tag = 'input window, operand 0']
    #allocation3 [shape = 's32[2]{0}', space=sflag, size = 0x8, scoped, tag = 'scoped memory for tpu_custom_call.1']
    #allocation4 [shape = 's32[2]{0}', space=sflag, size = 0x8, scoped, tag = 'scoped memory for tpu_custom_call.1']
    #allocation5 [shape = 'u8[32768]{0}', space=vmem, size = 0x8000, scoped, tag = 'input window, operand 3, single buffered']
    #allocation6 [shape = 's32[1]{0}', space=sflag, size = 0x4, scoped, tag = 'scoped memory for tpu_custom_call.1']
    #allocation7 [shape = 'u8[16384]{0}', space=vmem, size = 0x4000, scoped, tag = 'output window, operand 0']
    %9 = vsyncpa [#allocation3], 0
    %s10 = scalar_lea.sflag [#allocation3], 1
    %11 = vsyncpa %s10, 0
    %12 = vsyncpa [#allocation6], 0
    %13 = vsyncpa [#allocation4], 0
    %s14 = scalar_lea.sflag [#allocation4], 1
    %15 = vsyncpa %s14, 0
    loop: start=0, step=1, limit=6
    $region2: #{tpu_custom_call.1} parent=1 // loop_pre_header
      _
    $region3: #{tpu_custom_call.1} parent=1 // loop_header
      %s17 = sphi 0, %s21
      %p18 = scmp.ge.s32.totalorder %s17, 6
      %s27 = sphi 0, %s29
      %s30 = sphi 0, %s27
      %s31 = sphi 0, %s30
      %s47 = sphi 0, %s31
      %s51 = sphi 0, %s51
      %s53 = sphi 0, %s51
      %s54 = sphi 0, %s53
      %s68 = sphi 0, %s54
      %s72 = sphi 0, %s72
      %s74 = sphi 0, %s72
      %s75 = sphi 0, %s74
      %s89 = sphi 0, %s75
      %s93 = sphi 0, %s93
      %s95 = sphi 0, %s93
      %s96 = sphi 0, %s95
      %s110 = sphi 0, %s96
      %s116 = sphi 0, %s118
      %s119 = sphi 0, %s116
      %s120 = sphi 0, %s119
      %s136 = sphi 0, %s120
    $region4: #{tpu_custom_call.1} parent=1 // loop_header_branch
      %20 = sbr.rel (%p18) target = $region8
    $region5: #{tpu_custom_call.1} parent=1 // loop_body
      %s22 = ssub.s32 %s17, 1
      %s23 = ssub.s32 %s17, 2
      %s24 = sadd.s32 %s17, 1
      %s25 = ssub.s32 %s17, %s24
      %p26 = scmp.eq.s32.totalorder %s25, 0
      %s28 = sadd.s32 %s27, 1
      %s29 = scalar_select %p26, %s27, %s28
      %p32 = pneg %p26
      %p33 = scmp.eq.s32.totalorder %s17, 3
      %p34 = por %p32, %p33
      %p35 = scmp.ne.s32.totalorder %s27, %s30
      %p36 = scmp.eq.s32.totalorder %s17, 0
      %p37 = por %p35, %p36
      %p38 = scmp.ne.s32.totalorder %s27, %s30
      %p39 = scmp.eq.s32.totalorder %s22, 3
      %p40 = por %p38, %p39
      %p41 = scmp.ne.s32.totalorder %s30, %s31
      %p42 = scmp.eq.s32.totalorder %s22, 0
      %p43 = por %p41, %p42
      %p44 = scmp.ne.s32.totalorder %s30, %s31
      %p45 = scmp.eq.s32.totalorder %s23, 3
      %p46 = por %p44, %p45
      %p48 = scmp.ne.s32.totalorder %s31, %s47
      %p49 = scmp.eq.s32.totalorder %s23, 0
      %p50 = por %p48, %p49
      %s52 = sadd.s32 %s51, 1
      %p55 = scmp.eq.s32.totalorder %s17, 3
      %p56 = scmp.ne.s32.totalorder %s51, %s53
      %p57 = scmp.eq.s32.totalorder %s17, 0
      %p58 = por %p56, %p57
      %p59 = scmp.ne.s32.totalorder %s51, %s53
      %p60 = scmp.eq.s32.totalorder %s22, 3
      %p61 = por %p59, %p60
      %p62 = scmp.ne.s32.totalorder %s53, %s54
      %p63 = scmp.eq.s32.totalorder %s22, 0
      %p64 = por %p62, %p63
      %p65 = scmp.ne.s32.totalorder %s53, %s54
      %p66 = scmp.eq.s32.totalorder %s23, 3
      %p67 = por %p65, %p66
      %p69 = scmp.ne.s32.totalorder %s54, %s68
      %p70 = scmp.eq.s32.totalorder %s23, 0
      %p71 = por %p69, %p70
      %s73 = sadd.s32 %s72, 1
      %p76 = scmp.eq.s32.totalorder %s17, 3
      %p77 = scmp.ne.s32.totalorder %s72, %s74
      %p78 = scmp.eq.s32.totalorder %s17, 0
      %p79 = por %p77, %p78
      %p80 = scmp.ne.s32.totalorder %s72, %s74
      %p81 = scmp.eq.s32.totalorder %s22, 3
      %p82 = por %p80, %p81
      %p83 = scmp.ne.s32.totalorder %s74, %s75
      %p84 = scmp.eq.s32.totalorder %s22, 0
      %p85 = por %p83, %p84
      %p86 = scmp.ne.s32.totalorder %s74, %s75
      %p87 = scmp.eq.s32.totalorder %s23, 3
      %p88 = por %p86, %p87
      %p90 = scmp.ne.s32.totalorder %s75, %s89
      %p91 = scmp.eq.s32.totalorder %s23, 0
      %p92 = por %p90, %p91
      %s94 = sadd.s32 %s93, 1
      %p97 = scmp.eq.s32.totalorder %s17, 3
      %p98 = scmp.ne.s32.totalorder %s93, %s95
      %p99 = scmp.eq.s32.totalorder %s17, 0
      %p100 = por %p98, %p99
      %p101 = scmp.ne.s32.totalorder %s93, %s95
      %p102 = scmp.eq.s32.totalorder %s22, 3
      %p103 = por %p101, %p102
      %p104 = scmp.ne.s32.totalorder %s95, %s96
      %p105 = scmp.eq.s32.totalorder %s22, 0
      %p106 = por %p104, %p105
      %p107 = scmp.ne.s32.totalorder %s95, %s96
      %p108 = scmp.eq.s32.totalorder %s23, 3
      %p109 = por %p107, %p108
      %p111 = scmp.ne.s32.totalorder %s96, %s110
      %p112 = scmp.eq.s32.totalorder %s23, 0
      %p113 = por %p111, %p112
      %s114 = ssub.s32 %s17, %s24
      %p115 = scmp.eq.s32.totalorder %s114, 0
      %s117 = sadd.s32 %s116, 1
      %s118 = scalar_select %p115, %s116, %s117
      %p121 = pneg %p115
      %p122 = scmp.eq.s32.totalorder %s17, 3
      %p123 = por %p121, %p122
      %p124 = scmp.ne.s32.totalorder %s116, %s119
      %p125 = scmp.eq.s32.totalorder %s17, 0
      %p126 = por %p124, %p125
      %p127 = scmp.ne.s32.totalorder %s116, %s119
      %p128 = scmp.eq.s32.totalorder %s22, 3
      %p129 = por %p127, %p128
      %p130 = scmp.ne.s32.totalorder %s119, %s120
      %p131 = scmp.eq.s32.totalorder %s22, 0
      %p132 = por %p130, %p131
      %p133 = scmp.ne.s32.totalorder %s119, %s120
      %p134 = scmp.eq.s32.totalorder %s23, 3
      %p135 = por %p133, %p134
      %p137 = scmp.ne.s32.totalorder %s120, %s136
      %p138 = scmp.eq.s32.totalorder %s23, 0
      %p139 = por %p137, %p138
      %p140 = scmp.le.s32.totalorder 1, %s17
      %p141 = scmp.lt.s32.totalorder %s17, 5
      %p142 = pnand %p140, %p141
      %p143 = pneg %p142
      // Predicated region
      $region9: #{tpu_custom_call.1} parent=5 // pred_check
        _
      $region10: #{tpu_custom_call.1} parent=5 // pred_check_branch
        %145 = sbr.rel (%p142) target = $region12
      $region11: #{tpu_custom_call.1} parent=5 // pred_region
        %s146 = ssub.s32 %s17, 1
        // Predicated region
        $region13: #{tpu_custom_call.1} parent=11 // pred_check
          %p147 = pneg %p64
        $region14: #{tpu_custom_call.1} parent=11 // pred_check_branch
          %149 = sbr.rel (%p147) target = $region16
        $region15: #{tpu_custom_call.1} parent=11 // pred_region
          _
        $region16: #{tpu_custom_call.1} parent=11 // pred_fallthru
          _
        // Predicated region
        $region17: #{tpu_custom_call.1} parent=11 // pred_check
          %p150 = pneg %p85
        $region18: #{tpu_custom_call.1} parent=11 // pred_check_branch
          %152 = sbr.rel (%p150) target = $region20
        $region19: #{tpu_custom_call.1} parent=11 // pred_region
          _
        $region20: #{tpu_custom_call.1} parent=11 // pred_fallthru
          _
        // Predicated region
        $region21: #{tpu_custom_call.1} parent=11 // pred_check
          %p153 = pneg %p106
        $region22: #{tpu_custom_call.1} parent=11 // pred_check_branch
          %155 = sbr.rel (%p153) target = $region24
        $region23: #{tpu_custom_call.1} parent=11 // pred_region
          %s157 = ssub.s32 1024, 1024
          %158 = vsyncadd [#allocation6], %s157
          %s159 = sshll.u32 [#allocation5], 4
          %s160 = int_to_ptr.vmem [resolvable:$true] %s159
          %165 = dma.hbm_to_vmem [thread:$0]  %s3, 1024, %s160, [#allocation6], 64, 64, 4
        $region24: #{tpu_custom_call.1} parent=11 // pred_fallthru
          _
      $region12: #{tpu_custom_call.1} parent=5 // pred_fallthru
        _
      %p166 = scmp.lt.s32.totalorder %s17, 4
      // Predicated region
      $region25: #{tpu_custom_call.1} parent=5 // pred_check
        %p167 = pneg %p166
      $region26: #{tpu_custom_call.1} parent=5 // pred_check_branch
        %169 = sbr.rel (%p167) target = $region28
      $region27: #{tpu_custom_call.1} parent=5 // pred_region
        // Predicated region
        $region29: #{tpu_custom_call.1} parent=27 // pred_check
          %p170 = pneg %p37
        $region30: #{tpu_custom_call.1} parent=27 // pred_check_branch
          %172 = sbr.rel (%p170) target = $region32
        $region31: #{tpu_custom_call.1} parent=27 // pred_region
          %s173 = sand.u32 %s27, 1
          %s174 = scalar_lea.sflag [#allocation3], %s173
          %s175 = sand.u32 %s27, 1
          %s176 = smul.addr %s175, 16
          %s177 = scalar_lea.vmem [#allocation2], %s176
          %s178 = smul.u32 2, %s17
          %s179 = ssub.s32 7, %s178
          %p180 = scmp.lt.s32.totalorder %s179, 2
          %s181 = scalar_select %p180, %s179, 2
          %s182 = smul.u32 128, %s181
          %s184 = ssub.s32 256, %s182
          %185 = vsyncadd %s174, %s184
          %p186 = scmp.ne.s32.totalorder 0, %s182
          %s187 = smul.addr %s178, 128
          %s188 = scalar_lea.hbm %s0, %s187
          %s189 = smul.u32 8, %s181
          %s190 = sshll.u32 %s177, 4
          %s191 = int_to_ptr.vmem [resolvable:$true] %s190
          %s192 = sshll.u32 %s189, 4
          %196 = dma.hbm_to_vmem [thread:$0]  (%p186), %s188, %s192, %s191, %s174, 128, 128, 8
        $region32: #{tpu_custom_call.1} parent=27 // pred_fallthru
          _
      $region28: #{tpu_custom_call.1} parent=5 // pred_fallthru
        _
      %p197 = scmp.le.s32.totalorder 1, %s17
      %p198 = scmp.lt.s32.totalorder %s17, 5
      %p199 = pnand %p197, %p198
      %p200 = pneg %p199
      // Predicated region
      $region33: #{tpu_custom_call.1} parent=5 // pred_check
        _
      $region34: #{tpu_custom_call.1} parent=5 // pred_check_branch
        %202 = sbr.rel (%p199) target = $region36
      $region35: #{tpu_custom_call.1} parent=5 // pred_region
        %s203 = ssub.s32 %s17, 1
        %s204 = sand.u32 %s30, 1
        %s205 = scalar_lea.sflag [#allocation3], %s204
        %s206 = sand.u32 %s30, 1
        %s207 = smul.addr %s206, 16
        %s208 = scalar_lea.vmem [#allocation2], %s207
        // Predicated region
        $region37: #{tpu_custom_call.1} parent=35 // pred_check
          %p209 = pneg %p43
        $region38: #{tpu_custom_call.1} parent=35 // pred_check_branch
          %211 = sbr.rel (%p209) target = $region40
        $region39: #{tpu_custom_call.1} parent=35 // pred_region
          %212 = dma.done %s205, 256
        $region40: #{tpu_custom_call.1} parent=35 // pred_fallthru
          _
        // Predicated region
        $region41: #{tpu_custom_call.1} parent=35 // pred_check
          %p213 = pneg %p106
        $region42: #{tpu_custom_call.1} parent=35 // pred_check_branch
          %215 = sbr.rel (%p213) target = $region44
        $region43: #{tpu_custom_call.1} parent=35 // pred_region
          %216 = dma.done [#allocation6], 1024
        $region44: #{tpu_custom_call.1} parent=35 // pred_fallthru
          _
        %s217 = sand.u32 %s30, 1
        %s218 = scalar_lea.sflag [#allocation3], %s217
        %s219 = sand.u32 %s30, 1
        %s220 = smul.addr %s219, 16
        %s221 = scalar_lea.vmem [#allocation2], %s220
        %p222 = pneg %p43
        %p223 = pneg %p40
        %p224 = pneg %p64
        %p225 = pneg %p61
        %p226 = pneg %p85
        %p227 = pneg %p82
        %p228 = pneg %p106
        %p229 = pneg %p103
        %p230 = pneg %p132
        %p231 = pneg %p129
        %s232 = sand.u32 %s119, 1
        %s233 = scalar_lea.sflag [#allocation4], %s232
        %s234 = sand.u32 %s119, 1
        %s235 = smul.addr %s234, 16
        %s236 = scalar_lea.vmem [#allocation7], %s235
        %s237 = smul.u32 2, %s22
        %s238 = ssub.s32 7, %s237
        %p239 = scmp.lt.s32.totalorder %s238, 2
        %s240 = scalar_select %p239, %s238, 2
        %s241 = smul.u32 128, %s240
        %s242 = smul.u32 2, %s22
        %s243 = ssub.s32 7, %s242
        %p244 = scmp.lt.s32.totalorder %s243, 2
        %s245 = scalar_select %p244, %s243, 2
        %s246 = smul.u32 128, %s245
        %v248 = vld [vmem:[#allocation5] sm:$0xf]
        %v249 = vld [vmem:[#allocation5 + $0x4] sm:$0xf]
        %v250 = vld [vmem:[#allocation5 + $0x8] sm:$0xf]
        %v251 = vld [vmem:[#allocation5 + $0xc] sm:$0xf]
        %v252 = vld [vmem:[#allocation5 + $0x10] sm:$0xf]
        %v253 = vld [vmem:[#allocation5 + $0x14] sm:$0xf]
        %v254 = vld [vmem:[#allocation5 + $0x18] sm:$0xf]
        %v255 = vld [vmem:[#allocation5 + $0x1c] sm:$0xf]
        %v256 = vld [vmem:[#allocation5 + $0x20] sm:$0xf]
        %v257 = vld [vmem:[#allocation5 + $0x24] sm:$0xf]
        %v258 = vld [vmem:[#allocation5 + $0x28] sm:$0xf]
        %v259 = vld [vmem:[#allocation5 + $0x2c] sm:$0xf]
        %v260 = vld [vmem:[#allocation5 + $0x30] sm:$0xf]
        %v261 = vld [vmem:[#allocation5 + $0x34] sm:$0xf]
        %v262 = vld [vmem:[#allocation5 + $0x38] sm:$0xf]
        %v263 = vld [vmem:[#allocation5 + $0x3c] sm:$0xf]
        %v264 = vld [vmem:[%s208] sm:$0xff]
        %v265 = vld [vmem:[%s208 + $0x8] sm:$0xff]
        %v266 = vpack.c.bf16 %v265, %v264
        %v267 = vunpack.c.l.bf16 %v266
        %v268 = vunpack.c.h.bf16 %v266
        %v269 = vsub.f32 %v264, %v267
        %v270 = vsub.f32 %v265, %v268
        %v271 = vpack.c.bf16 %v270, %v269
        %v288 = vunpack.c.l.b16 %v248
        %v289 = vunpack.c.l.b16 %v249
        %v290 = vunpack.c.l.b16 %v250
        %v291 = vunpack.c.l.b16 %v251
        %v292 = vunpack.c.l.b16 %v252
        %v293 = vunpack.c.l.b16 %v253
        %v294 = vunpack.c.l.b16 %v254
        %v295 = vunpack.c.l.b16 %v255
        %v296 = vunpack.c.l.b16 %v256
        %v297 = vunpack.c.l.b16 %v257
        %v298 = vunpack.c.l.b16 %v258
        %v299 = vunpack.c.l.b16 %v259
        %v300 = vunpack.c.l.b16 %v260
        %v301 = vunpack.c.l.b16 %v261
        %v302 = vunpack.c.l.b16 %v262
        %v303 = vunpack.c.l.b16 %v263
        %v304 = vpack.c.b16 %v289, %v288
        %v305 = vpack.c.b16 %v291, %v290
        %v306 = vpack.c.b16 %v293, %v292
        %v307 = vpack.c.b16 %v295, %v294
        %v308 = vpack.c.b16 %v297, %v296
        %v309 = vpack.c.b16 %v299, %v298
        %v310 = vpack.c.b16 %v301, %v300
        %v311 = vpack.c.b16 %v303, %v302
        %320 = vmatprep.subr.bf16.mxu0 0
        %321 = vmatpush1.bf16.msra.mxu0 %v311
        %322 = vmatprep.subr.bf16.mxu0 0
        %323 = vmatpush1.bf16.msra.mxu0 %v310
        %324 = vmatprep.subr.bf16.mxu0 0
        %325 = vmatpush1.bf16.msra.mxu0 %v309
        %326 = vmatprep.subr.bf16.mxu0 0
        %327 = vmatpush1.bf16.msra.mxu0 %v308
        %328 = vmatprep.subr.bf16.mxu0 0
        %329 = vmatpush1.bf16.msra.mxu0 %v307
        %330 = vmatprep.subr.bf16.mxu0 0
        %331 = vmatpush1.bf16.msra.mxu0 %v306
        %332 = vmatprep.subr.bf16.mxu0 0
        %333 = vmatpush1.bf16.msra.mxu0 %v305
        %334 = vmatprep.subr.bf16.mxu0 0
        %335 = vmatpush1.bf16.msra.mxu0 %v304
        %336 = vmatprep.subr.bf16.mxu0 0
        %337 = vmatpush2.bf16.msra.mxu0 0
        %338 = vmatprep.subr.bf16.mxu0 0
        %339 = vmatpush2.bf16.msra.mxu0 0
        %340 = vmatprep.subr.bf16.mxu0 0
        %341 = vmatpush2.bf16.msra.mxu0 0
        %342 = vmatprep.subr.bf16.mxu0 0
        %343 = vmatpush2.bf16.msra.mxu0 0
        %344 = vmatprep.subr.bf16.mxu0 0
        %345 = vmatpush2.bf16.msra.mxu0 0
        %346 = vmatprep.subr.bf16.mxu0 0
        %347 = vmatpush2.bf16.msra.mxu0 0
        %348 = vmatprep.subr.bf16.mxu0 0
        %349 = vmatpush2.bf16.msra.mxu0 0
        %350 = vmatprep.subr.bf16.mxu0 0
        %351 = vmatpush2.bf16.msra.mxu0 0
        %352 = vmatprep.mubr.bf16.mxu0 0
        %353 = vmatmul.mubr.bf16.gmra.mxu0 %v271
        %v354 = vpop.f32.mrf.mxu0
        %v355 = vadd.f32 0.0, %v354
        %v356 = vpop.f32.mrf.mxu0
        %v357 = vpop.f32.mrf.mxu0
        %v358 = vadd.f32 0.0, %v357
        %v359 = vpop.f32.mrf.mxu0
        %360 = vdwg.mxu0
        %361 = vmatprep.subr.bf16.mxu0 0
        %362 = vmatpush1.bf16.msra.mxu0 %v311
        %363 = vmatprep.subr.bf16.mxu0 0
        %364 = vmatpush1.bf16.msra.mxu0 %v310
        %365 = vmatprep.subr.bf16.mxu0 0
        %366 = vmatpush1.bf16.msra.mxu0 %v309
        %367 = vmatprep.subr.bf16.mxu0 0
        %368 = vmatpush1.bf16.msra.mxu0 %v308
        %369 = vmatprep.subr.bf16.mxu0 0
        %370 = vmatpush1.bf16.msra.mxu0 %v307
        %371 = vmatprep.subr.bf16.mxu0 0
        %372 = vmatpush1.bf16.msra.mxu0 %v306
        %373 = vmatprep.subr.bf16.mxu0 0
        %374 = vmatpush1.bf16.msra.mxu0 %v305
        %375 = vmatprep.subr.bf16.mxu0 0
        %376 = vmatpush1.bf16.msra.mxu0 %v304
        %377 = vmatprep.subr.bf16.mxu0 0
        %378 = vmatpush2.bf16.msra.mxu0 0
        %379 = vmatprep.subr.bf16.mxu0 0
        %380 = vmatpush2.bf16.msra.mxu0 0
        %381 = vmatprep.subr.bf16.mxu0 0
        %382 = vmatpush2.bf16.msra.mxu0 0
        %383 = vmatprep.subr.bf16.mxu0 0
        %384 = vmatpush2.bf16.msra.mxu0 0
        %385 = vmatprep.subr.bf16.mxu0 0
        %386 = vmatpush2.bf16.msra.mxu0 0
        %387 = vmatprep.subr.bf16.mxu0 0
        %388 = vmatpush2.bf16.msra.mxu0 0
        %389 = vmatprep.subr.bf16.mxu0 0
        %390 = vmatpush2.bf16.msra.mxu0 0
        %391 = vmatprep.subr.bf16.mxu0 0
        %392 = vmatpush2.bf16.msra.mxu0 0
        %393 = vmatprep.mubr.bf16.mxu0 0
        %394 = vmatmul.mubr.bf16.gmra.mxu0 %v266
        %v395 = vpop.f32.mrf.mxu0
        %v396 = vadd.f32 %v355, %v395
        %v397 = vpop.f32.mrf.mxu0
        %v398 = vpop.f32.mrf.mxu0
        %v399 = vadd.f32 %v358, %v398
        %v400 = vpop.f32.mrf.mxu0
        %401 = vdwg.mxu0
        %v402 = vmul.f32 %v396, 0.03125
        %v403 = vmul.f32 %v399, 0.03125
        %v404 = vsub.f32 %v264, %v402
        %v405 = vsub.f32 %v265, %v403
        %v406 = vmul.f32 %v404, %v404
        %v407 = vmul.f32 %v405, %v405
        %v408 = vpack.c.bf16 %v407, %v406
        %v409 = vunpack.c.l.bf16 %v408
        %v410 = vunpack.c.h.bf16 %v408
        %v411 = vsub.f32 %v406, %v409
        %v412 = vsub.f32 %v407, %v410
        %v413 = vpack.c.bf16 %v412, %v411
        %414 = vmatprep.subr.bf16.mxu0 0
        %415 = vmatpush1.bf16.msra.mxu0 %v311
        %416 = vmatprep.subr.bf16.mxu0 0
        %417 = vmatpush1.bf16.msra.mxu0 %v310
        %418 = vmatprep.subr.bf16.mxu0 0
        %419 = vmatpush1.bf16.msra.mxu0 %v309
        %420 = vmatprep.subr.bf16.mxu0 0
        %421 = vmatpush1.bf16.msra.mxu0 %v308
        %422 = vmatprep.subr.bf16.mxu0 0
        %423 = vmatpush1.bf16.msra.mxu0 %v307
        %424 = vmatprep.subr.bf16.mxu0 0
        %425 = vmatpush1.bf16.msra.mxu0 %v306
        %426 = vmatprep.subr.bf16.mxu0 0
        %427 = vmatpush1.bf16.msra.mxu0 %v305
        %428 = vmatprep.subr.bf16.mxu0 0
        %429 = vmatpush1.bf16.msra.mxu0 %v304
        %430 = vmatprep.subr.bf16.mxu0 0
        %431 = vmatpush2.bf16.msra.mxu0 0
        %432 = vmatprep.subr.bf16.mxu0 0
        %433 = vmatpush2.bf16.msra.mxu0 0
        %434 = vmatprep.subr.bf16.mxu0 0
        %435 = vmatpush2.bf16.msra.mxu0 0
        %436 = vmatprep.subr.bf16.mxu0 0
        %437 = vmatpush2.bf16.msra.mxu0 0
        %438 = vmatprep.subr.bf16.mxu0 0
        %439 = vmatpush2.bf16.msra.mxu0 0
        %440 = vmatprep.subr.bf16.mxu0 0
        %441 = vmatpush2.bf16.msra.mxu0 0
        %442 = vmatprep.subr.bf16.mxu0 0
        %443 = vmatpush2.bf16.msra.mxu0 0
        %444 = vmatprep.subr.bf16.mxu0 0
        %445 = vmatpush2.bf16.msra.mxu0 0
        %446 = vmatprep.mubr.bf16.mxu0 0
        %447 = vmatmul.mubr.bf16.gmra.mxu0 %v413
        %v448 = vpop.f32.mrf.mxu0
        %v449 = vadd.f32 0.0, %v448
        %v450 = vpop.f32.mrf.mxu0
        %v451 = vpop.f32.mrf.mxu0
        %v452 = vadd.f32 0.0, %v451
        %v453 = vpop.f32.mrf.mxu0
        %454 = vdwg.mxu0
        %455 = vmatprep.subr.bf16.mxu0 0
        %456 = vmatpush1.bf16.msra.mxu0 %v311
        %457 = vmatprep.subr.bf16.mxu0 0
        %458 = vmatpush1.bf16.msra.mxu0 %v310
        %459 = vmatprep.subr.bf16.mxu0 0
        %460 = vmatpush1.bf16.msra.mxu0 %v309
        %461 = vmatprep.subr.bf16.mxu0 0
        %462 = vmatpush1.bf16.msra.mxu0 %v308
        %463 = vmatprep.subr.bf16.mxu0 0
        %464 = vmatpush1.bf16.msra.mxu0 %v307
        %465 = vmatprep.subr.bf16.mxu0 0
        %466 = vmatpush1.bf16.msra.mxu0 %v306
        %467 = vmatprep.subr.bf16.mxu0 0
        %468 = vmatpush1.bf16.msra.mxu0 %v305
        %469 = vmatprep.subr.bf16.mxu0 0
        %470 = vmatpush1.bf16.msra.mxu0 %v304
        %471 = vmatprep.subr.bf16.mxu0 0
        %472 = vmatpush2.bf16.msra.mxu0 0
        %473 = vmatprep.subr.bf16.mxu0 0
        %474 = vmatpush2.bf16.msra.mxu0 0
        %475 = vmatprep.subr.bf16.mxu0 0
        %476 = vmatpush2.bf16.msra.mxu0 0
        %477 = vmatprep.subr.bf16.mxu0 0
        %478 = vmatpush2.bf16.msra.mxu0 0
        %479 = vmatprep.subr.bf16.mxu0 0
        %480 = vmatpush2.bf16.msra.mxu0 0
        %481 = vmatprep.subr.bf16.mxu0 0
        %482 = vmatpush2.bf16.msra.mxu0 0
        %483 = vmatprep.subr.bf16.mxu0 0
        %484 = vmatpush2.bf16.msra.mxu0 0
        %485 = vmatprep.subr.bf16.mxu0 0
        %486 = vmatpush2.bf16.msra.mxu0 0
        %487 = vmatprep.mubr.bf16.mxu0 0
        %488 = vmatmul.mubr.bf16.gmra.mxu0 %v408
        %v489 = vpop.f32.mrf.mxu0
        %v490 = vadd.f32 %v449, %v489
        %v491 = vpop.f32.mrf.mxu0
        %v492 = vpop.f32.mrf.mxu0
        %v493 = vadd.f32 %v452, %v492
        %v494 = vpop.f32.mrf.mxu0
        %495 = vdwg.mxu0
        %v496 = vmul.f32 %v490, 0.03125
        %v497 = vmul.f32 %v493, 0.03125
        %v498 = vadd.f32 %v496, 1e-05
        %v499 = vadd.f32 %v497, 1e-05
        %v500 = vrsqrt.pop %v498
        %v501 = vrsqrt.pop %v499
        %v502 = vld [vmem:[%s1] sm:$0x1]
        %v503 = vld [vmem:[%s2] sm:$0x1]
        %v504 = vmul.f32 %v404, %v500
        %v505 = vmul.f32 %v405, %v501
        %v507 = vlaneseq
        %v508 = vshrl.u32 %v507, 7
        %v509 = vsub.s32 0, %v508
        %v510 = vrot.slane %v502, %v509
        %v512 = vmul.f32 %v504, %v510
        %v513 = vmul.f32 %v505, %v510
        %v515 = vlaneseq
        %v516 = vshrl.u32 %v515, 7
        %v517 = vsub.s32 0, %v516
        %v518 = vrot.slane %v503, %v517
        %v520 = vadd.f32 %v512, %v518
        %v521 = vadd.f32 %v513, %v518
        %522 = vst [vmem:[%s236] sm:$0xff] %v520
        %523 = vst [vmem:[%s236 + $0x8] sm:$0xff] %v521
        %s524 = sand.u32 %s119, 1
        %s525 = scalar_lea.sflag [#allocation4], %s524
        %s526 = sand.u32 %s119, 1
        %s527 = smul.addr %s526, 16
        %s528 = scalar_lea.vmem [#allocation7], %s527
        // Predicated region
        $region45: #{tpu_custom_call.1} parent=35 // pred_check
          %p529 = pneg %p129
        $region46: #{tpu_custom_call.1} parent=35 // pred_check_branch
          %531 = sbr.rel (%p529) target = $region48
        $region47: #{tpu_custom_call.1} parent=35 // pred_region
          %s532 = smul.u32 2, %s22
          %s533 = ssub.s32 7, %s532
          %p534 = scmp.lt.s32.totalorder %s533, 2
          %s535 = scalar_select %p534, %s533, 2
          %s536 = smul.u32 128, %s535
          %s538 = ssub.s32 256, %s536
          %539 = vsyncadd %s525, %s538
          %p540 = scmp.ne.s32.totalorder 0, %s536
          %s541 = smul.addr %s532, 128
          %s542 = scalar_lea.hbm %s4, %s541
          %s543 = smul.u32 8, %s535
          %s544 = sshll.u32 %s528, 4
          %s545 = int_to_ptr.vmem [resolvable:$true] %s544
          %s546 = sshll.u32 %s543, 4
          %550 = dma.vmem_to_hbm [thread:$0]  (%p540), %s545, %s546, %s542, %s525, 128, 128, 8
        $region48: #{tpu_custom_call.1} parent=35 // pred_fallthru
          _
      $region36: #{tpu_custom_call.1} parent=5 // pred_fallthru
        _
      %p551 = scmp.le.s32.totalorder 2, %s17
      // Predicated region
      $region49: #{tpu_custom_call.1} parent=5 // pred_check
        %p552 = pneg %p551
      $region50: #{tpu_custom_call.1} parent=5 // pred_check_branch
        %554 = sbr.rel (%p552) target = $region52
      $region51: #{tpu_custom_call.1} parent=5 // pred_region
        %s555 = ssub.s32 %s17, 2
        // Predicated region
        $region53: #{tpu_custom_call.1} parent=51 // pred_check
          %p556 = pneg %p135
        $region54: #{tpu_custom_call.1} parent=51 // pred_check_branch
          %558 = sbr.rel (%p556) target = $region56
        $region55: #{tpu_custom_call.1} parent=51 // pred_region
          %s559 = sand.u32 %s120, 1
          %s560 = scalar_lea.sflag [#allocation4], %s559
          %s561 = sand.u32 %s120, 1
          %s562 = smul.addr %s561, 16
          %s563 = scalar_lea.vmem [#allocation7], %s562
          %564 = dma.done %s560, 256
        $region56: #{tpu_custom_call.1} parent=51 // pred_fallthru
          _
      $region52: #{tpu_custom_call.1} parent=5 // pred_fallthru
        _
    $region6: #{tpu_custom_call.1} parent=1 // loop_footer
      %s21 = sadd.s32 1, %s17
    $region7: #{tpu_custom_call.1} parent=1 // loop_footer_branch
      %16 = sbr.rel target = $region3
    $region8: #{tpu_custom_call.1} parent=1 // loop_exit
      _
    %565 = vsyncpa [#allocation3], 1
    %s566 = scalar_lea.sflag [#allocation3], 1
    %567 = vsyncpa %s566, 1
    %568 = vsyncpa [#allocation6], 1
    %569 = vsyncpa [#allocation4], 1
    %s570 = scalar_lea.sflag [#allocation4], 1
    %571 = vsyncpa %s570, 1

</llo_original>
